<compile_context>
chip_gen: v7x
topology: tpu7x:2x2x1
jax: 0.10.0
libtpu: 0.0.40
codegen_flags: <defaults>
</compile_context>

<pallas_src>
import jax
import jax.numpy as jnp
from jax.experimental import pallas as pl
from jax.experimental.pallas import tpu as pltpu


# ---------------------------------------------------------------------------
# Kernels
# ---------------------------------------------------------------------------

def _fused_linear_add_small_kernel(x_ref, wt_ref, bo_ref, o_ref):
    # Single-step kernel: all operands resident in VMEM, no grid, no scratch.
    # y = x @ W^T + (bias + other); weight was pre-transposed to (IN, OUT).
    o_ref[...] = (
        jnp.dot(x_ref[...], wt_ref[...], preferred_element_type=jnp.float32)
        + bo_ref[...]
    ).astype(o_ref.dtype)


def _fused_linear_add_tiled_kernel(x_ref, wt_ref, bo_ref, o_ref):
    # Grid: (M-tiles, N-tiles, K-tiles); K (reduction) last. Output is f32,
    # so accumulate directly into the resident output block — no acc scratch.
    k = pl.program_id(2)

    @pl.when(k == 0)
    def _():
        # Initialize with the folded bias+other (broadcast over the batch tile).
        o_ref[...] = jnp.broadcast_to(bo_ref[...], o_ref.shape).astype(o_ref.dtype)

    o_ref[...] += jnp.dot(
        x_ref[...], wt_ref[...], preferred_element_type=jnp.float32
    ).astype(o_ref.dtype)


# ---------------------------------------------------------------------------
# Host-side wrappers
# ---------------------------------------------------------------------------

def _round_up(v, m):
    return ((v + m - 1) // m) * m


def prepare_params(weight, bias, other):
    """One-time parameter prep (outside the per-call hot path):
       * transpose the (OUT, IN) torch-layout weight to (IN, OUT) so the kernel
         runs a plain row-major MXU contraction (no per-tile XLU transpose),
       * fold bias + other into a single (1, OUT) operand (one fewer DMA/add).
    """
    wt = jnp.asarray(weight).T                       # (IN, OUT) — one-time copy
    bo = (jnp.asarray(bias) + jnp.asarray(other)).reshape(1, -1)   # (1, OUT)
    return wt, bo


def model_forward(x, wt, bo, *, tm=None, tn=None, tk=None):
    """x: (B, IN) f32, wt: (IN, OUT) f32 (pre-transposed), bo: (1, OUT) f32."""
    B, IN = x.shape
    IN2, OUT = wt.shape
    assert IN == IN2 and bo.shape == (1, OUT)

    # ---------------- small path: whole problem fits easily in VMEM ---------
    # This is the path the original module's (1,10)x(10,10) shapes take:
    # single invocation, full-extent blocks (block dims == array dims satisfy
    # the (8,128) rule), no padding, no grid/accumulator bookkeeping.
    nbytes = 4 * (B * IN + IN * OUT + OUT + B * OUT)
    if nbytes <= (4 << 20):
        return pl.pallas_call(
            _fused_linear_add_small_kernel,
            out_shape=jax.ShapeDtypeStruct((B, OUT), x.dtype),
            in_specs=[
                pl.BlockSpec((B, IN), lambda: (0, 0)),
                pl.BlockSpec((IN, OUT), lambda: (0, 0)),
                pl.BlockSpec((1, OUT), lambda: (0, 0)),
            ],
            out_specs=pl.BlockSpec((B, OUT), lambda: (0, 0)),
        )(x, wt, bo)

    # ---------------- large path: tiled (M, N, K) matmul --------------------
    # Lane-dense tiles: tm multiple of 8, tn/tk multiples of 128. Sized so the
    # double-buffered x/w tiles + resident f32 output fit per-generation VMEM
    # (v5e 16 MiB scoped default, v6e/v7x 32 MiB -> limit raised below).
    tm = tm if tm is not None else min(_round_up(B, 8), 256)
    tn = tn if tn is not None else min(_round_up(OUT, 128), 512)
    tk = tk if tk is not None else min(_round_up(IN, 128), 1024)

    # v7x megacore: ensure >=2 tiles on the parallel N axis when OUT allows it.
    if _round_up(OUT, tn) // tn < 2 and OUT >= 256:
        tn = _round_up(_round_up(OUT, 128) // 2, 128)

    Bp, INp, OUTp = _round_up(B, tm), _round_up(IN, tk), _round_up(OUT, tn)

    # TODO(synk): in a real model, pad/cache wt_p/bo_p once at parameter init
    # instead of per call; the per-call pad below is an extra HBM pass.
    x_p = x if (Bp, INp) == (B, IN) else jnp.pad(x, ((0, Bp - B), (0, INp - IN)))
    wt_p = wt if (INp, OUTp) == (IN, OUT) else jnp.pad(wt, ((0, INp - IN), (0, OUTp - OUT)))
    bo_p = bo if OUTp == OUT else jnp.pad(bo, ((0, 0), (0, OUTp - OUT)))

    grid = (Bp // tm, OUTp // tn, INp // tk)

    out_p = pl.pallas_call(
        _fused_linear_add_tiled_kernel,
        out_shape=jax.ShapeDtypeStruct((Bp, OUTp), x.dtype),
        grid=grid,
        in_specs=[
            pl.BlockSpec((tm, tk), lambda i, j, k: (i, k)),   # x tile
            pl.BlockSpec((tk, tn), lambda i, j, k: (k, j)),   # (IN, OUT) weight tile
            pl.BlockSpec((1, tn), lambda i, j, k: (0, j)),    # folded bias+other
        ],
        out_specs=pl.BlockSpec((tm, tn), lambda i, j, k: (i, j)),
        compiler_params=pltpu.CompilerParams(
            dimension_semantics=("parallel", "parallel", "arbitrary"),
            vmem_limit_bytes=64 << 20,
        ),
    )(x_p, wt_p, bo_p)

    if (Bp, OUTp) != (B, OUT):
        out_p = out_p[:B, :OUT]
    return out_p


if __name__ == "__main__":
    key = jax.random.PRNGKey(0)
    k_x, k_w, k_b, k_o = jax.random.split(key, 4)

    # Shapes implied by the PyTorch module: x1 = randn(1, 10), Linear(10, 10).
    B, IN, OUT = 1, 10, 10
    x1 = jax.random.normal(k_x, (B, IN), dtype=jnp.float32)
    # nn.Linear default init: U(-1/sqrt(in_features), 1/sqrt(in_features)).
    bound = 1.0 / (IN ** 0.5)
    weight = jax.random.uniform(k_w, (OUT, IN), jnp.float32, -bound, bound)
    bias = jax.random.uniform(k_b, (OUT,), jnp.float32, -bound, bound)
    other = jax.random.uniform(k_o, (OUT,), jnp.float32)   # torch.rand -> U(0,1)

    # One-time parameter prep (hot path only runs the pallas_call).
    wt, bo = prepare_params(weight, bias, other)

    out = model_forward(x1, wt, bo)
    jax.block_until_ready(out)

    # Reference check in plain JAX.
    ref = x1 @ weight.T + bias + other
    assert out.shape == (B, OUT)
    assert jnp.allclose(out, ref, atol=1e-5, rtol=1e-5), "mismatch vs reference"
    print("KERNEL_OK")
</pallas_src>

<mosaic_0001>
module attributes {stable_mosaic.version = 11 : i64} {
  func.func @_fused_linear_add_small_kernel(%arg0: memref<1x10xf32, #tpu.memory_space<vmem>>, %arg1: memref<10x10xf32, #tpu.memory_space<vmem>>, %arg2: memref<1x10xf32, #tpu.memory_space<vmem>>, %arg3: memref<1x10xf32, #tpu.memory_space<vmem>>) attributes {dimension_semantics = [], scalar_prefetch = 0 : i64, scratch_operands = 0 : i64, tpu.core_type = #tpu.core_type<tc>} {
    %c0 = arith.constant 0 : index
    %c0_0 = arith.constant 0 : index
    %0 = vector.load %arg0[%c0, %c0_0] : memref<1x10xf32, #tpu.memory_space<vmem>>, vector<1x10xf32>
    %c0_1 = arith.constant 0 : index
    %c0_2 = arith.constant 0 : index
    %1 = vector.load %arg1[%c0_1, %c0_2] : memref<10x10xf32, #tpu.memory_space<vmem>>, vector<10x10xf32>
    %cst = arith.constant dense<0.000000e+00> : vector<1x10xf32>
    %2 = tpu.matmul %0, %1, %cst {dimension_numbers = #tpu.dot_dimension_numbers<[1], [0], [0], [1], [0, 0, 1, 1], [], []>} : vector<1x10xf32>, vector<10x10xf32>, vector<1x10xf32> -> vector<1x10xf32>
    %c0_3 = arith.constant 0 : index
    %c0_4 = arith.constant 0 : index
    %3 = vector.load %arg2[%c0_3, %c0_4] : memref<1x10xf32, #tpu.memory_space<vmem>>, vector<1x10xf32>
    %4 = arith.addf %2, %3 : vector<1x10xf32>
    %c0_5 = arith.constant 0 : index
    %c0_6 = arith.constant 0 : index
    %5 = vector.load %arg3[%c0_5, %c0_6] : memref<1x10xf32, #tpu.memory_space<vmem>>, vector<1x10xf32>
    tpu.vector_store %arg3[%c0_5, %c0_6], %4 {strides = array<i32>} : memref<1x10xf32, #tpu.memory_space<vmem>>, vector<1x10xf32>,
    return
  }
}

</mosaic_0001>

<llo_original>
// kernel: tpu_custom_call.1
$region0: #{tpu_custom_call.1}
  #allocation0 [shape = 'u32[]', space=smem, size = 0x4, offset = 0x4, fixed_abs, tag = 'smem constant byte address 0x4 - core index']
  #allocation1 [shape = 'u32[144,128]{1,0:T(1,128)}', space=vmem, size = 0x12000, scoped, tag = 'internal scratch']
  %s0 = inlined_call_operand.hbm [shape: f32[1,10], index: 0, kind: input, shape index: {}]
  %s1 = inlined_call_operand.hbm [shape: f32[10,10], index: 1, kind: input, shape index: {}]
  %s2 = inlined_call_operand.vmem [shape: f32[1,10], index: 2, kind: input, shape index: {}]
  %s3 = inlined_call_operand.hbm [shape: f32[1,10], index: 3, kind: output, shape index: {}]
  %s4 = sld [smem:[#allocation0]]
  $region30: #{tpu_custom_call.1} parent=0
    _
  %s6 = ssub.s32 1, %s4
  %s7 = scalar_select 0, %s6, %s4
  $region1: #{tpu_custom_call.1} parent=0
    #allocation2 [shape = 'u8[512]{0}', space=vmem, size = 0x400, scoped, tag = 'input window, operand 0, single buffered']
    #allocation3 [shape = 's32[1]{0}', space=sflag, size = 0x4, scoped, tag = 'scoped memory for tpu_custom_call.1']
    #allocation4 [shape = 's32[1]{0}', space=sflag, size = 0x4, scoped, tag = 'scoped memory for tpu_custom_call.1']
    #allocation5 [shape = 'u8[8192]{0}', space=vmem, size = 0x2000, scoped, tag = 'input window, operand 1, single buffered']
    #allocation6 [shape = 's32[1]{0}', space=sflag, size = 0x4, scoped, tag = 'scoped memory for tpu_custom_call.1']
    #allocation7 [shape = 'u8[512]{0}', space=vmem, size = 0x400, scoped, tag = 'output window, operand 0, single buffered']
    %8 = vsyncpa [#allocation3], 0
    %9 = vsyncpa [#allocation6], 0
    %10 = vsyncpa [#allocation4], 0
    // Predicated region
    $region2: #{tpu_custom_call.1} parent=1 // pred_check
      _
    $region3: #{tpu_custom_call.1} parent=1 // pred_check_branch
      %12 = sbr.rel (0) target = $region5
    $region4: #{tpu_custom_call.1} parent=1 // pred_region
      %s14 = ssub.s32 16, 16
      %15 = vsyncadd [#allocation3], %s14
      %s17 = sshll.u32 [#allocation2], 4
      %s18 = int_to_ptr.vmem [resolvable:$true] %s17
      %20 = dma.hbm_to_vmem [thread:$0]  %s0, 16, %s18, [#allocation3]
    $region5: #{tpu_custom_call.1} parent=1 // pred_fallthru
      _
    // Predicated region
    $region6: #{tpu_custom_call.1} parent=1 // pred_check
      _
    $region7: #{tpu_custom_call.1} parent=1 // pred_check_branch
      %22 = sbr.rel (0) target = $region9
    $region8: #{tpu_custom_call.1} parent=1 // pred_region
      %s24 = ssub.s32 256, 256
      %25 = vsyncadd [#allocation6], %s24
      %s26 = sshll.u32 [#allocation5], 4
      %s27 = int_to_ptr.vmem [resolvable:$true] %s26
      %32 = dma.hbm_to_vmem [thread:$0]  %s1, 256, %s27, [#allocation6], 128, 128, 8
    $region9: #{tpu_custom_call.1} parent=1 // pred_fallthru
      _
    // Predicated region
    $region10: #{tpu_custom_call.1} parent=1 // pred_check
      _
    $region11: #{tpu_custom_call.1} parent=1 // pred_check_branch
      %34 = sbr.rel (0) target = $region13
    $region12: #{tpu_custom_call.1} parent=1 // pred_region
      _
    $region13: #{tpu_custom_call.1} parent=1 // pred_fallthru
      _
    // Predicated region
    $region14: #{tpu_custom_call.1} parent=1 // pred_check
      _
    $region15: #{tpu_custom_call.1} parent=1 // pred_check_branch
      %36 = sbr.rel (0) target = $region17
    $region16: #{tpu_custom_call.1} parent=1 // pred_region
      %37 = dma.done [#allocation3], 16
    $region17: #{tpu_custom_call.1} parent=1 // pred_fallthru
      _
    // Predicated region
    $region18: #{tpu_custom_call.1} parent=1 // pred_check
      _
    $region19: #{tpu_custom_call.1} parent=1 // pred_check_branch
      %39 = sbr.rel (0) target = $region21
    $region20: #{tpu_custom_call.1} parent=1 // pred_region
      %40 = dma.done [#allocation6], 256
    $region21: #{tpu_custom_call.1} parent=1 // pred_fallthru
      _
    %v41 = vld [vmem:[#allocation2] sm:$0x1]
    %v42 = vld [vmem:[#allocation5] sm:$0xff]
    %v43 = vld [vmem:[#allocation5 + $0x8] sm:$0x3]
    %v44 = vld [vmem:[%s2] sm:$0x1]
    %vm45 = vcmask 80896
    %v47 = vsel %vm45, %v41, 0
    %vm49 = vcmask 1041408
    %v51 = vsel %vm49, %v43, 0
    %53 = vmatprep.subr.mxu0 0.0
    %54 = vmatpush1.msra.mxu0 %v42
    %55 = vmatprep.subr.mxu0 0.0
    %56 = vmatpush1.msra.mxu0 %v51
    %57 = vmatprep.subr.mxu0 0.0
    %58 = vmatpush1.msra.mxu0 0.0
    %59 = vmatprep.subr.mxu0 0.0
    %60 = vmatpush1.msra.mxu0 0.0
    %61 = vmatprep.subr.mxu0 0.0
    %62 = vmatpush1.msra.mxu0 0.0
    %63 = vmatprep.subr.mxu0 0.0
    %64 = vmatpush1.msra.mxu0 0.0
    %65 = vmatprep.subr.mxu0 0.0
    %66 = vmatpush1.msra.mxu0 0.0
    %67 = vmatprep.subr.mxu0 0.0
    %68 = vmatpush1.msra.mxu0 0.0
    %69 = vmatprep.subr.mxu0 0.0
    %70 = vmatpush1.msra.mxu0 0.0
    %71 = vmatprep.subr.mxu0 0.0
    %72 = vmatpush1.msra.mxu0 0.0
    %73 = vmatprep.subr.mxu0 0.0
    %74 = vmatpush1.msra.mxu0 0.0
    %75 = vmatprep.subr.mxu0 0.0
    %76 = vmatpush1.msra.mxu0 0.0
    %77 = vmatprep.subr.mxu0 0.0
    %78 = vmatpush1.msra.mxu0 0.0
    %79 = vmatprep.subr.mxu0 0.0
    %80 = vmatpush1.msra.mxu0 0.0
    %81 = vmatprep.subr.mxu0 0.0
    %82 = vmatpush1.msra.mxu0 0.0
    %83 = vmatprep.subr.mxu0 0.0
    %84 = vmatpush1.msra.mxu0 0.0
    %85 = vmatprep.subr.mxu0 0.0
    %86 = vmatpush1.msra.mxu0 0.0
    %87 = vmatprep.subr.mxu0 0.0
    %88 = vmatpush1.msra.mxu0 0.0
    %89 = vmatprep.subr.mxu0 0.0
    %90 = vmatpush1.msra.mxu0 0.0
    %91 = vmatprep.subr.mxu0 0.0
    %92 = vmatpush1.msra.mxu0 0.0
    %93 = vmatprep.subr.mxu0 0.0
    %94 = vmatpush1.msra.mxu0 0.0
    %95 = vmatprep.subr.mxu0 0.0
    %96 = vmatpush1.msra.mxu0 0.0
    %97 = vmatprep.subr.mxu0 0.0
    %98 = vmatpush1.msra.mxu0 0.0
    %99 = vmatprep.subr.mxu0 0.0
    %100 = vmatpush1.msra.mxu0 0.0
    %101 = vmatprep.subr.mxu0 0.0
    %102 = vmatpush1.msra.mxu0 0.0
    %103 = vmatprep.subr.mxu0 0.0
    %104 = vmatpush1.msra.mxu0 0.0
    %105 = vmatprep.subr.mxu0 0.0
    %106 = vmatpush1.msra.mxu0 0.0
    %107 = vmatprep.subr.mxu0 0.0
    %108 = vmatpush1.msra.mxu0 0.0
    %109 = vmatprep.subr.mxu0 0.0
    %110 = vmatpush1.msra.mxu0 0.0
    %111 = vmatprep.subr.mxu0 0.0
    %112 = vmatpush1.msra.mxu0 0.0
    %113 = vmatprep.subr.mxu0 0.0
    %114 = vmatpush1.msra.mxu0 0.0
    %115 = vmatprep.subr.mxu0 0.0
    %116 = vmatpush1.msra.mxu0 0.0
    %117 = vmatprep.mubr.f32.mxu0 0.0
    %118 = vmatmul.mubr.f32.gmra.mrb[0].mxu0 %v47
    %v119 = vpop.f32.mrb[0].mxu0
    %v120 = vadd.f32 %v44, %v119
    %v121 = vpop.f32.mrb[0].mxu0
    %122 = vdwg.mxu0
    %vm123 = vcmask 73728
    %124 = vst.msk [vmem:[#allocation7] sm:$0x1] %vm123, %v120
    // Predicated region
    $region22: #{tpu_custom_call.1} parent=1 // pred_check
      _
    $region23: #{tpu_custom_call.1} parent=1 // pred_check_branch
      %126 = sbr.rel (0) target = $region25
    $region24: #{tpu_custom_call.1} parent=1 // pred_region
      %s128 = ssub.s32 16, 16
      %129 = vsyncadd [#allocation4], %s128
      %s131 = sshll.u32 [#allocation7], 4
      %s132 = int_to_ptr.vmem [resolvable:$true] %s131
      %134 = dma.vmem_to_hbm [thread:$0]  %s132, 16, %s3, [#allocation4]
    $region25: #{tpu_custom_call.1} parent=1 // pred_fallthru
      _
    // Predicated region
    $region26: #{tpu_custom_call.1} parent=1 // pred_check
      _
    $region27: #{tpu_custom_call.1} parent=1 // pred_check_branch
      %136 = sbr.rel (0) target = $region29
    $region28: #{tpu_custom_call.1} parent=1 // pred_region
      %137 = dma.done [#allocation4], 16
    $region29: #{tpu_custom_call.1} parent=1 // pred_fallthru
      _
    %138 = vsyncpa [#allocation3], 1
    %139 = vsyncpa [#allocation6], 1
    %140 = vsyncpa [#allocation4], 1

</llo_original>
